<compile_context>
chip_gen: v7x
topology: tpu7x:2x2x1
jax: 0.10.0
libtpu: 0.0.40
codegen_flags: <defaults>
</compile_context>

<pallas_src>
import functools

import jax
import jax.numpy as jnp
from jax import lax
from jax.experimental import pallas as pl
from jax.experimental.pallas import tpu as pltpu

LANE = 128
N_SPLIT = 2  # leading 'parallel' grid axis -> both TensorCores on v7x


def _round_up(x, m):
    return ((x + m - 1) // m) * m


def _bce_sum_kernel(x_ref, t_ref, o_ref, acc_ref, *,
                    n_valid, tile_rows, tiles_per_split):
    c = pl.program_id(0)   # split index (parallel axis)
    i = pl.program_id(1)   # tile index within split (reduction axis)

    # Zero the lane-wise accumulator at the start of each split's reduction.
    @pl.when(i == 0)
    def _():
        acc_ref[...] = jnp.zeros_like(acc_ref)

    x = x_ref[...].astype(jnp.float32)
    t = t_ref[...].astype(jnp.float32)

    # Logits-domain BCE: one exp + one log1p per element (shared softplus core).
    #   log(sigmoid(x))     = -(max(-x, 0) + log1p(exp(-|x|)))
    #   log(1 - sigmoid(x)) = -(max( x, 0) + log1p(exp(-|x|)))
    sp = jnp.log1p(jnp.exp(-jnp.abs(x)))
    log_p = -(jnp.maximum(-x, 0.0) + sp)
    log_1mp = -(jnp.maximum(x, 0.0) + sp)
    # PyTorch nn.BCELoss clamps each log term at -100.
    log_p = jnp.maximum(log_p, -100.0)
    log_1mp = jnp.maximum(log_1mp, -100.0)
    loss = -(t * log_p + (1.0 - t) * log_1mp)

    # Mask out-of-range elements (tail of the last tile and fully out-of-range
    # tiles whose DMA index was clamped in the index_map).
    tile_logical = c * tiles_per_split + i
    base = tile_logical * (tile_rows * LANE)
    row_ids = lax.broadcasted_iota(jnp.int32, (tile_rows, LANE), 0)
    col_ids = lax.broadcasted_iota(jnp.int32, (tile_rows, LANE), 1)
    elem_idx = base + row_ids * LANE + col_ids
    loss = jnp.where(elem_idx < n_valid, loss, 0.0)

    # Lane-parallel partial sums: fold rows down to one (8, 128) vreg (VPU adds).
    acc_ref[...] += jnp.sum(loss.reshape(tile_rows // 8, 8, LANE), axis=0)

    # Emit this split's partial sums on its last reduction step.
    @pl.when(i == tiles_per_split - 1)
    def _():
        o_ref[...] = acc_ref[...]


def custom_bce_loss(outputs, targets, *, tile_rows=4096):
    """sigmoid(outputs) -> elementwise BCE vs targets -> scalar sum."""
    x = outputs.reshape(-1)
    t = targets.reshape(-1)
    n = x.shape[0]

    # Lane-dense 2-D slab [rows, 128]. Only if n is not a multiple of 128 do we
    # pad (<= 127 elements); padded elements are masked out inside the kernel.
    n_lanes = _round_up(n, LANE)
    pad = n_lanes - n
    if pad:
        x = jnp.pad(x, (0, pad))
        t = jnp.pad(t, (0, pad))
    rows = n_lanes // LANE
    x2 = x.reshape(rows, LANE)
    t2 = t.reshape(rows, LANE)

    # Big tiles (default 4096 rows = 2 MiB f32 per input per pipeline buffer,
    # 8 MiB total double-buffered: fits all generations' scoped VMEM), clamped
    # down for small inputs; multiple of 16 rows so the block satisfies the
    # sublane tiling constraints for f32 and bf16 inputs alike.
    tile_rows = max(16, min(_round_up(tile_rows, 16), _round_up(rows, 16)))
    num_tiles = pl.cdiv(rows, tile_rows)
    tiles_per_split = pl.cdiv(num_tiles, N_SPLIT)

    def in_map(c, i):
        # Clamp so the DMA never reads past the array; out-of-range logical
        # tiles are fully masked in the kernel (contribute exactly 0).
        return (jnp.minimum(c * tiles_per_split + i, num_tiles - 1), 0)

    kernel = functools.partial(
        _bce_sum_kernel,
        n_valid=n, tile_rows=tile_rows, tiles_per_split=tiles_per_split)

    partial_sums = pl.pallas_call(
        kernel,
        out_shape=jax.ShapeDtypeStruct((N_SPLIT * 8, LANE), jnp.float32),
        grid=(N_SPLIT, tiles_per_split),
        in_specs=[
            pl.BlockSpec((tile_rows, LANE), in_map),
            pl.BlockSpec((tile_rows, LANE), in_map),
        ],
        out_specs=pl.BlockSpec((8, LANE), lambda c, i: (c, 0)),
        scratch_shapes=[pltpu.VMEM((8, LANE), jnp.float32)],
        compiler_params=pltpu.CompilerParams(
            dimension_semantics=("parallel", "arbitrary"),
            vmem_limit_bytes=32 * 1024 * 1024),
    )(x2, t2)

    # Single cross-lane reduce, done once outside the grid loop.
    return jnp.sum(partial_sums)


def _reference(outputs, targets):
    # Mirrors PyTorch: sigmoid, then BCELoss(reduction='none') with -100 clamp, sum.
    p = jax.nn.sigmoid(outputs.astype(jnp.float32))
    t = targets.astype(jnp.float32)
    loss = -(t * jnp.maximum(jnp.log(p), -100.0)
             + (1.0 - t) * jnp.maximum(jnp.log(1.0 - p), -100.0))
    return jnp.sum(loss)


if __name__ == "__main__":
    key = jax.random.PRNGKey(0)
    k1, k2 = jax.random.split(key)
    shape = (2, 4, 16, 16)
    outputs = jax.random.normal(k1, shape, dtype=jnp.float32) * 2.0
    targets = (jax.random.uniform(k2, shape) > 0.5).astype(jnp.float32)

    loss = custom_bce_loss(outputs, targets)
    jax.block_until_ready(loss)

    ref = _reference(outputs, targets)
    assert jnp.allclose(loss, ref, rtol=1e-4, atol=1e-3), (loss, ref)

    print("KERNEL_OK")
</pallas_src>

<mosaic_0001>
module attributes {stable_mosaic.version = 11 : i64} {
  func.func @_bce_sum_kernel(%arg0: i32, %arg1: i32, %arg2: memref<16x128xf32, #tpu.memory_space<vmem>>, %arg3: memref<16x128xf32, #tpu.memory_space<vmem>>, %arg4: memref<8x128xf32, #tpu.memory_space<vmem>>, %arg5: memref<8x128xf32, #tpu.memory_space<vmem>>) attributes {dimension_semantics = [#tpu.dimension_semantics<parallel>, #tpu.dimension_semantics<arbitrary>], iteration_bounds = array<i64: 2, 1>, scalar_prefetch = 0 : i64, scratch_operands = 1 : i64, tpu.core_type = #tpu.core_type<tc>, window_params = [{transform_indices = @transform_0, window_bounds = array<i64: 16, 128>}, {transform_indices = @transform_1, window_bounds = array<i64: 16, 128>}, {transform_indices = @transform_2, window_bounds = array<i64: 8, 128>}]} {
    %c0_i32 = arith.constant 0 : i32
    %0 = arith.cmpi eq, %arg1, %c0_i32 : i32
    %1 = arith.extui %0 : i1 to i32
    %c0_i32_0 = arith.constant 0 : i32
    %2 = arith.cmpi ne, %1, %c0_i32_0 : i32
    scf.if %2 {
      %cst_22 = arith.constant 0.000000e+00 : f32
      %55 = vector.broadcast %cst_22 : f32 to vector<8x128xf32>
      %c0_23 = arith.constant 0 : index
      %c0_24 = arith.constant 0 : index
      %56 = vector.load %arg5[%c0_23, %c0_24] : memref<8x128xf32, #tpu.memory_space<vmem>>, vector<8x128xf32>
      tpu.vector_store %arg5[%c0_23, %c0_24], %55 {strides = array<i32>} : memref<8x128xf32, #tpu.memory_space<vmem>>, vector<8x128xf32>,
    } else {
    }
    %c0 = arith.constant 0 : index
    %c0_1 = arith.constant 0 : index
    %3 = vector.load %arg2[%c0, %c0_1] : memref<16x128xf32, #tpu.memory_space<vmem>>, vector<16x128xf32>
    %c0_2 = arith.constant 0 : index
    %c0_3 = arith.constant 0 : index
    %4 = vector.load %arg3[%c0_2, %c0_3] : memref<16x128xf32, #tpu.memory_space<vmem>>, vector<16x128xf32>
    %5 = math.absf %3 : vector<16x128xf32>
    %cst = arith.constant 0.000000e+00 : f32
    %6 = vector.broadcast %cst : f32 to vector<16x128xf32>
    %7 = arith.subf %6, %5 : vector<16x128xf32>
    %8 = math.exp %7 : vector<16x128xf32>
    %9 = math.log1p %8 : vector<16x128xf32>
    %cst_4 = arith.constant 0.000000e+00 : f32
    %10 = vector.broadcast %cst_4 : f32 to vector<16x128xf32>
    %11 = arith.subf %10, %3 : vector<16x128xf32>
    %cst_5 = arith.constant 0.000000e+00 : f32
    %12 = vector.broadcast %cst_5 : f32 to vector<16x128xf32>
    %13 = arith.maximumf %11, %12 : vector<16x128xf32>
    %14 = arith.addf %13, %9 : vector<16x128xf32>
    %cst_6 = arith.constant 0.000000e+00 : f32
    %15 = vector.broadcast %cst_6 : f32 to vector<16x128xf32>
    %16 = arith.subf %15, %14 : vector<16x128xf32>
    %cst_7 = arith.constant 0.000000e+00 : f32
    %17 = vector.broadcast %cst_7 : f32 to vector<16x128xf32>
    %18 = arith.maximumf %3, %17 : vector<16x128xf32>
    %19 = arith.addf %18, %9 : vector<16x128xf32>
    %cst_8 = arith.constant 0.000000e+00 : f32
    %20 = vector.broadcast %cst_8 : f32 to vector<16x128xf32>
    %21 = arith.subf %20, %19 : vector<16x128xf32>
    %cst_9 = arith.constant -1.000000e+02 : f32
    %22 = vector.broadcast %cst_9 : f32 to vector<16x128xf32>
    %23 = arith.maximumf %16, %22 : vector<16x128xf32>
    %cst_10 = arith.constant -1.000000e+02 : f32
    %24 = vector.broadcast %cst_10 : f32 to vector<16x128xf32>
    %25 = arith.maximumf %21, %24 : vector<16x128xf32>
    %26 = arith.mulf %4, %23 : vector<16x128xf32>
    %cst_11 = arith.constant 1.000000e+00 : f32
    %27 = vector.broadcast %cst_11 : f32 to vector<16x128xf32>
    %28 = arith.subf %27, %4 : vector<16x128xf32>
    %29 = arith.mulf %28, %25 : vector<16x128xf32>
    %30 = arith.addf %26, %29 : vector<16x128xf32>
    %cst_12 = arith.constant 0.000000e+00 : f32
    %31 = vector.broadcast %cst_12 : f32 to vector<16x128xf32>
    %32 = arith.subf %31, %30 : vector<16x128xf32>
    %c1_i32 = arith.constant 1 : i32
    %33 = arith.muli %arg0, %c1_i32 : i32
    %34 = arith.addi %33, %arg1 : i32
    %c2048_i32 = arith.constant 2048 : i32
    %35 = arith.muli %34, %c2048_i32 : i32
    %36 = tpu.iota {dimensions = array<i32: 0>} : vector<16x128xi32>
    %37 = tpu.iota {dimensions = array<i32: 1>} : vector<16x128xi32>
    %c128_i32 = arith.constant 128 : i32
    %38 = vector.broadcast %c128_i32 : i32 to vector<16x128xi32>
    %39 = arith.muli %36, %38 : vector<16x128xi32>
    %40 = vector.broadcast %35 : i32 to vector<16x128xi32>
    %41 = arith.addi %40, %39 : vector<16x128xi32>
    %42 = arith.addi %41, %37 : vector<16x128xi32>
    %c2048_i32_13 = arith.constant 2048 : i32
    %43 = vector.broadcast %c2048_i32_13 : i32 to vector<16x128xi32>
    %44 = arith.cmpi slt, %42, %43 : vector<16x128xi32>
    %cst_14 = arith.constant 0.000000e+00 : f32
    %45 = vector.broadcast %cst_14 : f32 to vector<16x128xf32>
    %46 = arith.select %44, %32, %45 : vector<16x128xi1>, vector<16x128xf32>
    %c0_15 = arith.constant 0 : index
    %c0_16 = arith.constant 0 : index
    %47 = vector.load %arg5[%c0_15, %c0_16] : memref<8x128xf32, #tpu.memory_space<vmem>>, vector<8x128xf32>
    %48 = vector.shape_cast %46 : vector<16x128xf32> to vector<2x8x128xf32>
    %cst_17 = arith.constant dense<0.000000e+00> : vector<8x128xf32>
    %49 = vector.multi_reduction <add>, %48, %cst_17 [0] : vector<2x8x128xf32> to vector<8x128xf32>
    %50 = arith.addf %47, %49 : vector<8x128xf32>
    %c0_18 = arith.constant 0 : index
    %c0_19 = arith.constant 0 : index
    %51 = vector.load %arg5[%c0_18, %c0_19] : memref<8x128xf32, #tpu.memory_space<vmem>>, vector<8x128xf32>
    tpu.vector_store %arg5[%c0_18, %c0_19], %50 {strides = array<i32>} : memref<8x128xf32, #tpu.memory_space<vmem>>, vector<8x128xf32>,
    %c0_i32_20 = arith.constant 0 : i32
    %52 = arith.cmpi eq, %arg1, %c0_i32_20 : i32
    %53 = arith.extui %52 : i1 to i32
    %c0_i32_21 = arith.constant 0 : i32
    %54 = arith.cmpi ne, %53, %c0_i32_21 : i32
    scf.if %54 {
      %c0_22 = arith.constant 0 : index
      %c0_23 = arith.constant 0 : index
      %55 = vector.load %arg5[%c0_22, %c0_23] : memref<8x128xf32, #tpu.memory_space<vmem>>, vector<8x128xf32>
      %c0_24 = arith.constant 0 : index
      %c0_25 = arith.constant 0 : index
      %56 = vector.load %arg4[%c0_24, %c0_25] : memref<8x128xf32, #tpu.memory_space<vmem>>, vector<8x128xf32>
      tpu.vector_store %arg4[%c0_24, %c0_25], %55 {strides = array<i32>} : memref<8x128xf32, #tpu.memory_space<vmem>>, vector<8x128xf32>,
    } else {
    }
    return
  }
  func.func @transform_0(%arg0: i32, %arg1: i32) -> (i32, i32) {
    %c1_i32 = arith.constant 1 : i32
    %0 = arith.muli %arg0, %c1_i32 : i32
    %1 = arith.addi %0, %arg1 : i32
    %c0_i32 = arith.constant 0 : i32
    %2 = arith.minsi %1, %c0_i32 : i32
    %c0_i32_0 = arith.constant 0 : i32
    %c0_i32_1 = arith.constant 0 : i32
    return %2, %c0_i32_0 : i32, i32
  }
  func.func @transform_1(%arg0: i32, %arg1: i32) -> (i32, i32) {
    %c1_i32 = arith.constant 1 : i32
    %0 = arith.muli %arg0, %c1_i32 : i32
    %1 = arith.addi %0, %arg1 : i32
    %c0_i32 = arith.constant 0 : i32
    %2 = arith.minsi %1, %c0_i32 : i32
    %c0_i32_0 = arith.constant 0 : i32
    %c0_i32_1 = arith.constant 0 : i32
    return %2, %c0_i32_0 : i32, i32
  }
  func.func @transform_2(%arg0: i32, %arg1: i32) -> (i32, i32) {
    %c0_i32 = arith.constant 0 : i32
    %c0_i32_0 = arith.constant 0 : i32
    return %arg0, %c0_i32 : i32, i32
  }
}

</mosaic_0001>

<llo_original>
// kernel: tpu_custom_call.1
$region0: #{tpu_custom_call.1}
  #allocation0 [shape = 'u32[]', space=smem, size = 0x4, offset = 0x4, fixed_abs, tag = 'smem constant byte address 0x4 - core index']
  #allocation1 [shape = 'u32[144,128]{1,0:T(1,128)}', space=vmem, size = 0x12000, scoped, tag = 'internal scratch']
  #allocation2 [shape = 'f32[8,128]{1,0:T(8,128)}', space=vmem, size = 0x1000, scoped, tag = 'scratch operand']
  %s0 = inlined_call_operand.hbm [shape: f32[16,128], index: 0, kind: input, shape index: {}]
  %s1 = inlined_call_operand.hbm [shape: f32[16,128], index: 1, kind: input, shape index: {}]
  %s2 = inlined_call_operand.hbm [shape: f32[16,128], index: 2, kind: output, shape index: {}]
  %s3 = sld [smem:[#allocation0]]
  $region57: #{tpu_custom_call.1} parent=0
    _
  %s5 = ssub.s32 1, %s3
  %s6 = scalar_select 0, %s5, %s3
  $region1: #{tpu_custom_call.1} parent=0
    #allocation3 [shape = 'u8[16384]{0}', space=vmem, size = 0x4000, scoped, tag = 'input window, operand 0']
    #allocation4 [shape = 's32[2]{0}', space=sflag, size = 0x8, scoped, tag = 'scoped memory for tpu_custom_call.1']
    #allocation5 [shape = 's32[2]{0}', space=sflag, size = 0x8, scoped, tag = 'scoped memory for tpu_custom_call.1']
    #allocation6 [shape = 'u8[16384]{0}', space=vmem, size = 0x4000, scoped, tag = 'input window, operand 1']
    #allocation7 [shape = 's32[2]{0}', space=sflag, size = 0x8, scoped, tag = 'scoped memory for tpu_custom_call.1']
    #allocation8 [shape = 'u8[8192]{0}', space=vmem, size = 0x2000, scoped, tag = 'output window, operand 0']
    %7 = vsyncpa [#allocation4], 0
    %s8 = scalar_lea.sflag [#allocation4], 1
    %9 = vsyncpa %s8, 0
    %10 = vsyncpa [#allocation7], 0
    %s11 = scalar_lea.sflag [#allocation7], 1
    %12 = vsyncpa %s11, 0
    %13 = vsyncpa [#allocation5], 0
    %s14 = scalar_lea.sflag [#allocation5], 1
    %15 = vsyncpa %s14, 0
    loop: start=0, step=1, limit=4
    $region2: #{tpu_custom_call.1} parent=1 // loop_pre_header
      _
    $region3: #{tpu_custom_call.1} parent=1 // loop_header
      %s17 = sphi 0, %s21
      %p18 = scmp.ge.s32.totalorder %s17, 4
      %s24 = sphi 0, %s36
      %s25 = sphi 0, %s32
      %s26 = sphi 0, %s24
      %s27 = sphi 0, %s25
      %s28 = sphi 0, %s26
      %s29 = sphi 0, %s27
      %s45 = sphi 0, %s47
      %s48 = sphi 0, %s45
      %s49 = sphi 0, %s48
      %s65 = sphi 0, %s49
      %s77 = sphi 0, %s79
      %s80 = sphi 0, %s77
      %s81 = sphi 0, %s80
      %s97 = sphi 0, %s81
      %s103 = sphi 0, %s105
      %s106 = sphi 0, %s103
      %s107 = sphi 0, %s106
      %s123 = sphi 0, %s107
    $region4: #{tpu_custom_call.1} parent=1 // loop_header_branch
      %20 = sbr.rel (%p18) target = $region8
    $region5: #{tpu_custom_call.1} parent=1 // loop_body
      %s22 = ssub.s32 %s17, 1
      %s23 = ssub.s32 %s17, 2
      %s30 = sadd.s32 1, %s25
      %p31 = scmp.ge.s32.totalorder %s30, 1
      %s32 = scalar_select %p31, 0, %s30
      %s33 = sadd.s32 1, %s24
      %s34 = scalar_select %p31, %s33, %s24
      %p35 = scmp.ge.s32.totalorder %s34, 2
      %s36 = scalar_select %p35, 0, %s34
      %s37 = sadd.s32 %s24, %s25
      %p38 = scmp.lt.s32.totalorder %s37, 0
      %s39 = scalar_select %p38, %s37, 0
      %s40 = sadd.s32 %s36, %s32
      %p41 = scmp.lt.s32.totalorder %s40, 0
      %s42 = scalar_select %p41, %s40, 0
      %s43 = ssub.s32 %s39, %s42
      %p44 = scmp.eq.s32.totalorder %s43, 0
      %s46 = sadd.s32 %s45, 1
      %s47 = scalar_select %p44, %s45, %s46
      %p50 = pneg %p44
      %p51 = scmp.eq.s32.totalorder %s17, 1
      %p52 = por %p50, %p51
      %p53 = scmp.ne.s32.totalorder %s45, %s48
      %p54 = scmp.eq.s32.totalorder %s17, 0
      %p55 = por %p53, %p54
      %p56 = scmp.ne.s32.totalorder %s45, %s48
      %p57 = scmp.eq.s32.totalorder %s22, 1
      %p58 = por %p56, %p57
      %p59 = scmp.ne.s32.totalorder %s48, %s49
      %p60 = scmp.eq.s32.totalorder %s22, 0
      %p61 = por %p59, %p60
      %p62 = scmp.ne.s32.totalorder %s48, %s49
      %p63 = scmp.eq.s32.totalorder %s23, 1
      %p64 = por %p62, %p63
      %p66 = scmp.ne.s32.totalorder %s49, %s65
      %p67 = scmp.eq.s32.totalorder %s23, 0
      %p68 = por %p66, %p67
      %s69 = sadd.s32 %s24, %s25
      %p70 = scmp.lt.s32.totalorder %s69, 0
      %s71 = scalar_select %p70, %s69, 0
      %s72 = sadd.s32 %s36, %s32
      %p73 = scmp.lt.s32.totalorder %s72, 0
      %s74 = scalar_select %p73, %s72, 0
      %s75 = ssub.s32 %s71, %s74
      %p76 = scmp.eq.s32.totalorder %s75, 0
      %s78 = sadd.s32 %s77, 1
      %s79 = scalar_select %p76, %s77, %s78
      %p82 = pneg %p76
      %p83 = scmp.eq.s32.totalorder %s17, 1
      %p84 = por %p82, %p83
      %p85 = scmp.ne.s32.totalorder %s77, %s80
      %p86 = scmp.eq.s32.totalorder %s17, 0
      %p87 = por %p85, %p86
      %p88 = scmp.ne.s32.totalorder %s77, %s80
      %p89 = scmp.eq.s32.totalorder %s22, 1
      %p90 = por %p88, %p89
      %p91 = scmp.ne.s32.totalorder %s80, %s81
      %p92 = scmp.eq.s32.totalorder %s22, 0
      %p93 = por %p91, %p92
      %p94 = scmp.ne.s32.totalorder %s80, %s81
      %p95 = scmp.eq.s32.totalorder %s23, 1
      %p96 = por %p94, %p95
      %p98 = scmp.ne.s32.totalorder %s81, %s97
      %p99 = scmp.eq.s32.totalorder %s23, 0
      %p100 = por %p98, %p99
      %s101 = ssub.s32 %s24, %s36
      %p102 = scmp.eq.s32.totalorder %s101, 0
      %s104 = sadd.s32 %s103, 1
      %s105 = scalar_select %p102, %s103, %s104
      %p108 = pneg %p102
      %p109 = scmp.eq.s32.totalorder %s17, 1
      %p110 = por %p108, %p109
      %p111 = scmp.ne.s32.totalorder %s103, %s106
      %p112 = scmp.eq.s32.totalorder %s17, 0
      %p113 = por %p111, %p112
      %p114 = scmp.ne.s32.totalorder %s103, %s106
      %p115 = scmp.eq.s32.totalorder %s22, 1
      %p116 = por %p114, %p115
      %p117 = scmp.ne.s32.totalorder %s106, %s107
      %p118 = scmp.eq.s32.totalorder %s22, 0
      %p119 = por %p117, %p118
      %p120 = scmp.ne.s32.totalorder %s106, %s107
      %p121 = scmp.eq.s32.totalorder %s23, 1
      %p122 = por %p120, %p121
      %p124 = scmp.ne.s32.totalorder %s107, %s123
      %p125 = scmp.eq.s32.totalorder %s23, 0
      %p126 = por %p124, %p125
      %p127 = scmp.le.s32.totalorder 1, %s17
      %p128 = scmp.lt.s32.totalorder %s17, 3
      %p129 = pnand %p127, %p128
      %p130 = pneg %p129
      // Predicated region
      $region9: #{tpu_custom_call.1} parent=5 // pred_check
        _
      $region10: #{tpu_custom_call.1} parent=5 // pred_check_branch
        %132 = sbr.rel (%p129) target = $region12
      $region11: #{tpu_custom_call.1} parent=5 // pred_region
        %s133 = ssub.s32 %s17, 1
      $region12: #{tpu_custom_call.1} parent=5 // pred_fallthru
        _
      %p134 = scmp.lt.s32.totalorder %s17, 2
      // Predicated region
      $region13: #{tpu_custom_call.1} parent=5 // pred_check
        %p135 = pneg %p134
      $region14: #{tpu_custom_call.1} parent=5 // pred_check_branch
        %137 = sbr.rel (%p135) target = $region16
      $region15: #{tpu_custom_call.1} parent=5 // pred_region
        // Predicated region
        $region17: #{tpu_custom_call.1} parent=15 // pred_check
          %p138 = pneg %p55
        $region18: #{tpu_custom_call.1} parent=15 // pred_check_branch
          %140 = sbr.rel (%p138) target = $region20
        $region19: #{tpu_custom_call.1} parent=15 // pred_region
          %s141 = sand.u32 %s45, 1
          %s142 = scalar_lea.sflag [#allocation4], %s141
          %s143 = sand.u32 %s45, 1
          %s144 = smul.addr %s143, 16
          %s145 = scalar_lea.vmem [#allocation3], %s144
          %s146 = sadd.s32 %s24, %s25
          %p147 = scmp.lt.s32.totalorder %s146, 0
          %s148 = scalar_select %p147, %s146, 0
          %s149 = smul.u32 2, %s148
          %s151 = ssub.s32 256, 256
          %152 = vsyncadd %s142, %s151
          %s153 = smul.addr %s149, 128
          %s154 = scalar_lea.hbm %s0, %s153
          %s155 = sshll.u32 %s145, 4
          %s156 = int_to_ptr.vmem [resolvable:$true] %s155
          %161 = dma.hbm_to_vmem [thread:$0]  %s154, 256, %s156, %s142, 128, 128, 8
        $region20: #{tpu_custom_call.1} parent=15 // pred_fallthru
          _
        // Predicated region
        $region21: #{tpu_custom_call.1} parent=15 // pred_check
          %p162 = pneg %p87
        $region22: #{tpu_custom_call.1} parent=15 // pred_check_branch
          %164 = sbr.rel (%p162) target = $region24
        $region23: #{tpu_custom_call.1} parent=15 // pred_region
          %s165 = sand.u32 %s77, 1
          %s166 = scalar_lea.sflag [#allocation7], %s165
          %s167 = sand.u32 %s77, 1
          %s168 = smul.addr %s167, 16
          %s169 = scalar_lea.vmem [#allocation6], %s168
          %s170 = sadd.s32 %s24, %s25
          %p171 = scmp.lt.s32.totalorder %s170, 0
          %s172 = scalar_select %p171, %s170, 0
          %s173 = smul.u32 2, %s172
          %s175 = ssub.s32 256, 256
          %176 = vsyncadd %s166, %s175
          %s177 = smul.addr %s173, 128
          %s178 = scalar_lea.hbm %s1, %s177
          %s179 = sshll.u32 %s169, 4
          %s180 = int_to_ptr.vmem [resolvable:$true] %s179
          %185 = dma.hbm_to_vmem [thread:$0]  %s178, 256, %s180, %s166, 128, 128, 8
        $region24: #{tpu_custom_call.1} parent=15 // pred_fallthru
          _
      $region16: #{tpu_custom_call.1} parent=5 // pred_fallthru
        _
      %p186 = scmp.le.s32.totalorder 1, %s17
      %p187 = scmp.lt.s32.totalorder %s17, 3
      %p188 = pnand %p186, %p187
      %p189 = pneg %p188
      // Predicated region
      $region25: #{tpu_custom_call.1} parent=5 // pred_check
        _
      $region26: #{tpu_custom_call.1} parent=5 // pred_check_branch
        %191 = sbr.rel (%p188) target = $region28
      $region27: #{tpu_custom_call.1} parent=5 // pred_region
        %s192 = ssub.s32 %s17, 1
        %s193 = sand.u32 %s48, 1
        %s194 = scalar_lea.sflag [#allocation4], %s193
        %s195 = sand.u32 %s48, 1
        %s196 = smul.addr %s195, 16
        %s197 = scalar_lea.vmem [#allocation3], %s196
        // Predicated region
        $region29: #{tpu_custom_call.1} parent=27 // pred_check
          %p198 = pneg %p61
        $region30: #{tpu_custom_call.1} parent=27 // pred_check_branch
          %200 = sbr.rel (%p198) target = $region32
        $region31: #{tpu_custom_call.1} parent=27 // pred_region
          %201 = dma.done %s194, 256
        $region32: #{tpu_custom_call.1} parent=27 // pred_fallthru
          _
        %s202 = sand.u32 %s80, 1
        %s203 = scalar_lea.sflag [#allocation7], %s202
        %s204 = sand.u32 %s80, 1
        %s205 = smul.addr %s204, 16
        %s206 = scalar_lea.vmem [#allocation6], %s205
        // Predicated region
        $region33: #{tpu_custom_call.1} parent=27 // pred_check
          %p207 = pneg %p93
        $region34: #{tpu_custom_call.1} parent=27 // pred_check_branch
          %209 = sbr.rel (%p207) target = $region36
        $region35: #{tpu_custom_call.1} parent=27 // pred_region
          %210 = dma.done %s203, 256
        $region36: #{tpu_custom_call.1} parent=27 // pred_fallthru
          _
        %s211 = sand.u32 %s48, 1
        %s212 = scalar_lea.sflag [#allocation4], %s211
        %s213 = sand.u32 %s48, 1
        %s214 = smul.addr %s213, 16
        %s215 = scalar_lea.vmem [#allocation3], %s214
        %p216 = pneg %p61
        %p217 = pneg %p58
        %s218 = sand.u32 %s80, 1
        %s219 = scalar_lea.sflag [#allocation7], %s218
        %s220 = sand.u32 %s80, 1
        %s221 = smul.addr %s220, 16
        %s222 = scalar_lea.vmem [#allocation6], %s221
        %p223 = pneg %p93
        %p224 = pneg %p90
        %p225 = pneg %p119
        %p226 = pneg %p116
        %s227 = sand.u32 %s106, 1
        %s228 = scalar_lea.sflag [#allocation5], %s227
        %s229 = sand.u32 %s106, 1
        %s230 = smul.addr %s229, 8
        %s231 = scalar_lea.vmem [#allocation8], %s230
        %s232 = sadd.s32 %s26, %s27
        %p233 = scmp.lt.s32.totalorder %s232, 0
        %s234 = scalar_select %p233, %s232, 0
        %s235 = smul.u32 2, %s234
        %s236 = sadd.s32 %s26, %s27
        %p237 = scmp.lt.s32.totalorder %s236, 0
        %s238 = scalar_select %p237, %s236, 0
        %s239 = smul.u32 2, %s238
        %p240 = scmp.eq.s32.totalorder %s27, 0
        // Predicated region
        $region37: #{tpu_custom_call.1} parent=27 // pred_check
          %p241 = pneg %p240
        $region38: #{tpu_custom_call.1} parent=27 // pred_check_branch
          %243 = sbr.rel (%p241) target = $region40
        $region39: #{tpu_custom_call.1} parent=27 // pred_region
          %244 = vst [vmem:[#allocation2] sm:$0xff] 0.0
        $region40: #{tpu_custom_call.1} parent=27 // pred_fallthru
          _
        %v245 = vld [vmem:[%s197] sm:$0xff]
        %v246 = vld [vmem:[%s197 + $0x8] sm:$0xff]
        %v247 = vld [vmem:[%s206] sm:$0xff]
        %v248 = vld [vmem:[%s206 + $0x8] sm:$0xff]
        %v249 = vand.u32 2147483647, %v245
        %v250 = vand.u32 2147483647, %v246
        %v251 = vsub.f32 0.0, %v249
        %v252 = vsub.f32 0.0, %v250
        %v253 = vmul.f32 %v251, 1.442695
        %v254 = vpow.pop %v253
        %v255 = vmul.f32 %v252, 1.442695
        %v256 = vpow.pop %v255
        %v257 = vadd.f32 %v254, 1.0
        %v258 = vlog2.pop %v257
        %v259 = vmul.f32 %v258, 0.6931472
        %v260 = vmul.f32 -0.5, %v254
        %v261 = vadd.f32 %v260, 1.0
        %v262 = vmul.f32 %v261, %v254
        %v263 = vand.u32 2147483647, %v254
        %vm264 = vcmp.lt.f32.partialorder %v263, 0.0004427343
        %v265 = vsel %vm264, %v262, %v259
        %v266 = vadd.f32 %v256, 1.0
        %v267 = vlog2.pop %v266
        %v268 = vmul.f32 %v267, 0.6931472
        %v269 = vmul.f32 -0.5, %v256
        %v270 = vadd.f32 %v269, 1.0
        %v271 = vmul.f32 %v270, %v256
        %v272 = vand.u32 2147483647, %v256
        %vm273 = vcmp.lt.f32.partialorder %v272, 0.0004427343
        %v274 = vsel %vm273, %v271, %v268
        %v275 = vsub.f32 0.0, %v245
        %v276 = vsub.f32 0.0, %v246
        %v277 = vmax.f32 %v275, 0.0
        %v278 = vmax.f32 %v276, 0.0
        %v279 = vadd.f32 %v277, %v265
        %v280 = vadd.f32 %v278, %v274
        %v281 = vsub.f32 0.0, %v279
        %v282 = vsub.f32 0.0, %v280
        %v283 = vmax.f32 %v245, 0.0
        %v284 = vmax.f32 %v246, 0.0
        %v285 = vadd.f32 %v283, %v265
        %v286 = vadd.f32 %v284, %v274
        %v287 = vsub.f32 0.0, %v285
        %v288 = vsub.f32 0.0, %v286
        %v289 = vmax.f32 %v281, -100.0
        %v290 = vmax.f32 %v282, -100.0
        %v291 = vmax.f32 %v287, -100.0
        %v292 = vmax.f32 %v288, -100.0
        %v293 = vmul.f32 %v247, %v289
        %v294 = vmul.f32 %v248, %v290
        %v295 = vsub.f32 1.0, %v247
        %v296 = vsub.f32 1.0, %v248
        %v297 = vmul.f32 %v295, %v291
        %v298 = vmul.f32 %v296, %v292
        %v299 = vadd.f32 %v293, %v297
        %v300 = vadd.f32 %v294, %v298
        %v301 = vsub.f32 0.0, %v299
        %v302 = vsub.f32 0.0, %v300
        %s303 = sadd.s32 %s26, %s27
        %s304 = smul.u32 %s303, 2048
        %v305 = vlaneseq
        %v306 = vshrl.u32 %v305, 7
        %v307 = vadd.s32 %v306, 8
        %v308 = vlaneseq
        %v309 = vand.u32 %v308, 127
        %v310 = vmul.u32 %v306, 128
        %v311 = vmul.u32 %v307, 128
        %v312 = vstv %s304
        %v313 = vadd.s32 %v312, %v310
        %v314 = vadd.s32 %v312, %v311
        %v315 = vadd.s32 %v313, %v309
        %v316 = vadd.s32 %v314, %v309
        %vm317 = vcmp.lt.s32.totalorder %v315, 2048
        %vm318 = vcmp.lt.s32.totalorder %v316, 2048
        %v319 = vsel %vm317, %v301, 0.0
        %v320 = vsel %vm318, %v302, 0.0
        %v321 = vld [vmem:[#allocation2] sm:$0xff]
        %v322 = vadd.f32 %v319, %v320
        %v323 = vadd.f32 %v321, %v322
        %324 = vst [vmem:[#allocation2] sm:$0xff] %v323
        // Predicated region
        $region41: #{tpu_custom_call.1} parent=27 // pred_check
          %p325 = pneg %p240
        $region42: #{tpu_custom_call.1} parent=27 // pred_check_branch
          %327 = sbr.rel (%p325) target = $region44
        $region43: #{tpu_custom_call.1} parent=27 // pred_region
          %v328 = vld [vmem:[#allocation2] sm:$0xff]
          %329 = vst [vmem:[%s231] sm:$0xff] %v328
        $region44: #{tpu_custom_call.1} parent=27 // pred_fallthru
          _
        %s330 = sand.u32 %s106, 1
        %s331 = scalar_lea.sflag [#allocation5], %s330
        %s332 = sand.u32 %s106, 1
        %s333 = smul.addr %s332, 8
        %s334 = scalar_lea.vmem [#allocation8], %s333
        // Predicated region
        $region45: #{tpu_custom_call.1} parent=27 // pred_check
          %p335 = pneg %p116
        $region46: #{tpu_custom_call.1} parent=27 // pred_check_branch
          %337 = sbr.rel (%p335) target = $region48
        $region47: #{tpu_custom_call.1} parent=27 // pred_region
          %s339 = ssub.s32 128, 128
          %340 = vsyncadd %s331, %s339
          %s341 = smul.addr %s26, 128
          %s342 = scalar_lea.hbm %s2, %s341
          %s344 = sshll.u32 %s334, 4
          %s345 = int_to_ptr.vmem [resolvable:$true] %s344
          %347 = dma.vmem_to_hbm [thread:$0]  %s345, 128, %s342, %s331
        $region48: #{tpu_custom_call.1} parent=27 // pred_fallthru
          _
      $region28: #{tpu_custom_call.1} parent=5 // pred_fallthru
        _
      %p348 = scmp.le.s32.totalorder 2, %s17
      // Predicated region
      $region49: #{tpu_custom_call.1} parent=5 // pred_check
        %p349 = pneg %p348
      $region50: #{tpu_custom_call.1} parent=5 // pred_check_branch
        %351 = sbr.rel (%p349) target = $region52
      $region51: #{tpu_custom_call.1} parent=5 // pred_region
        %s352 = ssub.s32 %s17, 2
        // Predicated region
        $region53: #{tpu_custom_call.1} parent=51 // pred_check
          %p353 = pneg %p122
        $region54: #{tpu_custom_call.1} parent=51 // pred_check_branch
          %355 = sbr.rel (%p353) target = $region56
        $region55: #{tpu_custom_call.1} parent=51 // pred_region
          %s356 = sand.u32 %s107, 1
          %s357 = scalar_lea.sflag [#allocation5], %s356
          %s358 = sand.u32 %s107, 1
          %s359 = smul.addr %s358, 8
          %s360 = scalar_lea.vmem [#allocation8], %s359
          %361 = dma.done %s357, 128
        $region56: #{tpu_custom_call.1} parent=51 // pred_fallthru
          _
      $region52: #{tpu_custom_call.1} parent=5 // pred_fallthru
        _
    $region6: #{tpu_custom_call.1} parent=1 // loop_footer
      %s21 = sadd.s32 1, %s17
    $region7: #{tpu_custom_call.1} parent=1 // loop_footer_branch
      %16 = sbr.rel target = $region3
    $region8: #{tpu_custom_call.1} parent=1 // loop_exit
      _
    %362 = vsyncpa [#allocation4], 1
    %s363 = scalar_lea.sflag [#allocation4], 1
    %364 = vsyncpa %s363, 1
    %365 = vsyncpa [#allocation7], 1
    %s366 = scalar_lea.sflag [#allocation7], 1
    %367 = vsyncpa %s366, 1
    %368 = vsyncpa [#allocation5], 1
    %s369 = scalar_lea.sflag [#allocation5], 1
    %370 = vsyncpa %s369, 1

</llo_original>
